<compile_context>
chip_gen: v7x
topology: tpu7x:2x2x1
jax: 0.10.0
libtpu: 0.0.40
codegen_flags: <defaults>
</compile_context>

<pallas_src>
import jax
import jax.numpy as jnp
from jax.experimental import pallas as pl
from jax.experimental.pallas import tpu as pltpu


def _round_up(x, m):
    return ((x + m - 1) // m) * m


def _ffn_kernel(x_ref, w1_ref, b1_ref, w2_ref, b2_ref, o_ref, acc_ref):
    # x_ref:  (tm, Dp)       -- row tile (constant across the hidden axis)
    # w1_ref: (Dp, th)       -- slice of W1 along hidden
    # b1_ref: (1, th)
    # w2_ref: (th, Dop)      -- slice of W2 along hidden
    # b2_ref: (1, Dop)
    # o_ref:  (tm, Dop)
    # acc_ref:(tm, Dop) f32 scratch accumulator
    k = pl.program_id(1)

    @pl.when(k == 0)
    def _():
        # Fold the output bias into the accumulator init (saves a VPU add later).
        acc_ref[...] = jnp.broadcast_to(
            b2_ref[...].astype(jnp.float32), acc_ref.shape)

    # First linear, this hidden slice: (tm, Dp) @ (Dp, th) -> f32 on the MXU.
    h = jnp.dot(x_ref[...], w1_ref[...], preferred_element_type=jnp.float32)
    h = h + b1_ref[...].astype(jnp.float32)

    # GELU (tanh approximation), matching the PyTorch GELU module, in f32.
    c = jnp.float32(0.7978845608028654)  # sqrt(2 / pi)
    g = 0.5 * h * (1.0 + jnp.tanh(c * (h + 0.044715 * (h * h * h))))

    # Second linear partial product, accumulated in f32:
    # (tm, th) @ (th, Dop). Cast activation to the weight dtype (bf16 fast path).
    acc_ref[...] += jnp.dot(g.astype(w2_ref.dtype), w2_ref[...],
                            preferred_element_type=jnp.float32)

    @pl.when(k == pl.num_programs(1) - 1)
    def _():
        o_ref[...] = acc_ref[...].astype(o_ref.dtype)


def feedforward(x, w1, b1, w2, b2, *, tm=256, th=512):
    """x: [B, S, D]; w1: [D, H]; b1: [H]; w2: [H, Do]; b2: [Do] (H = 4*D, Do = D)."""
    B, S, D = x.shape
    H = w1.shape[1]
    Do = w2.shape[1]
    M = B * S

    # Row tile: clamp for tiny problems, pad M up to a multiple of the tile.
    tm_ = min(tm, _round_up(M, 8))
    Mp = _round_up(M, tm_)

    # Lane-dense padding of feature dims to multiples of 128.
    Dp = _round_up(D, 128)
    Dop = _round_up(Do, 128)
    Hp = _round_up(H, 128)
    th_ = min(th, Hp)
    Hp = _round_up(Hp, th_)          # make the hidden axis divisible by the tile

    x2d = jnp.pad(x.reshape(M, D), ((0, Mp - M), (0, Dp - D)))
    w1p = jnp.pad(w1, ((0, Dp - D), (0, Hp - H)))
    b1p = jnp.pad(b1, (0, Hp - H)).reshape(1, Hp)
    w2p = jnp.pad(w2, ((0, Hp - H), (0, Dop - Do)))
    b2p = jnp.pad(b2, (0, Dop - Do)).reshape(1, Dop)

    grid = (Mp // tm_, Hp // th_)    # (row tiles [parallel], hidden tiles [reduction])

    out_p = pl.pallas_call(
        _ffn_kernel,
        out_shape=jax.ShapeDtypeStruct((Mp, Dop), x.dtype),
        grid_spec=pltpu.PrefetchScalarGridSpec(
            num_scalar_prefetch=0,
            grid=grid,
            in_specs=[
                pl.BlockSpec((tm_, Dp), lambda i, k: (i, 0)),   # x rows (resident over k)
                pl.BlockSpec((Dp, th_), lambda i, k: (0, k)),   # W1 hidden slice
                pl.BlockSpec((1, th_), lambda i, k: (0, k)),    # b1 hidden slice
                pl.BlockSpec((th_, Dop), lambda i, k: (k, 0)),  # W2 hidden slice
                pl.BlockSpec((1, Dop), lambda i, k: (0, 0)),    # b2 (tiny, invariant)
            ],
            out_specs=pl.BlockSpec((tm_, Dop), lambda i, k: (i, 0)),
            scratch_shapes=[pltpu.VMEM((tm_, Dop), jnp.float32)],
        ),
        compiler_params=pltpu.CompilerParams(
            dimension_semantics=("parallel", "arbitrary")),
    )(x2d, w1p, b1p, w2p, b2p)

    return out_p[:M, :Do].reshape(B, S, Do)


def feedforward_ref(x, w1, b1, w2, b2):
    h = jnp.einsum("bsd,dh->bsh", x, w1) + b1
    c = jnp.sqrt(jnp.float32(2.0) / jnp.pi)
    g = 0.5 * h * (1.0 + jnp.tanh(c * (h + 0.044715 * h ** 3)))
    return jnp.einsum("bsh,hd->bsd", g, w2) + b2


if __name__ == "__main__":
    # Small shapes consistent with the module: emb_dim = 32, hidden = 4 * emb_dim = 128.
    B, S, D = 2, 8, 32
    H = 4 * D

    key = jax.random.PRNGKey(0)
    kx, k1, k2, k3, k4 = jax.random.split(key, 5)

    x = jax.random.normal(kx, (B, S, D), dtype=jnp.float32)
    # Deterministic synthetic parameters (shapes match nn.Linear(D, 4D) and nn.Linear(4D, D)).
    w1 = jax.random.normal(k1, (D, H), dtype=jnp.float32) * (1.0 / jnp.sqrt(D))
    b1 = jax.random.normal(k2, (H,), dtype=jnp.float32) * 0.01
    w2 = jax.random.normal(k3, (H, D), dtype=jnp.float32) * (1.0 / jnp.sqrt(H))
    b2 = jax.random.normal(k4, (D,), dtype=jnp.float32) * 0.01

    out = feedforward(x, w1, b1, w2, b2)
    out = jax.block_until_ready(out)

    ref = feedforward_ref(x, w1, b1, w2, b2)
    assert out.shape == (B, S, D)
    assert jnp.allclose(out, ref, atol=1e-4, rtol=1e-4), "mismatch vs JAX reference"

    print("KERNEL_OK")
</pallas_src>

<mosaic_0001>
module attributes {stable_mosaic.version = 11 : i64} {
  func.func @_ffn_kernel(%arg0: i32, %arg1: i32, %arg2: memref<16x128xf32, #tpu.memory_space<vmem>>, %arg3: memref<128x128xf32, #tpu.memory_space<vmem>>, %arg4: memref<1x128xf32, #tpu.memory_space<vmem>>, %arg5: memref<128x128xf32, #tpu.memory_space<vmem>>, %arg6: memref<1x128xf32, #tpu.memory_space<vmem>>, %arg7: memref<16x128xf32, #tpu.memory_space<vmem>>, %arg8: memref<16x128xf32, #tpu.memory_space<vmem>>) attributes {dimension_semantics = [#tpu.dimension_semantics<parallel>, #tpu.dimension_semantics<arbitrary>], iteration_bounds = array<i64: 1, 1>, scalar_prefetch = 0 : i64, scratch_operands = 1 : i64, tpu.core_type = #tpu.core_type<tc>, window_params = [{transform_indices = @transform_0, window_bounds = array<i64: 16, 128>}, {transform_indices = @transform_1, window_bounds = array<i64: 128, 128>}, {transform_indices = @transform_2, window_bounds = array<i64: 1, 128>}, {transform_indices = @transform_3, window_bounds = array<i64: 128, 128>}, {pipeline_mode = #tpu.pipeline_mode<synchronous>, transform_indices = @transform_4, window_bounds = array<i64: 1, 128>}, {transform_indices = @transform_5, window_bounds = array<i64: 16, 128>}]} {
    %c0_i32 = arith.constant 0 : i32
    %0 = arith.cmpi eq, %arg1, %c0_i32 : i32
    %1 = arith.extui %0 : i1 to i32
    %c0_i32_0 = arith.constant 0 : i32
    %2 = arith.cmpi ne, %1, %c0_i32_0 : i32
    scf.if %2 {
      %c0_19 = arith.constant 0 : index
      %c0_20 = arith.constant 0 : index
      %30 = vector.load %arg6[%c0_19, %c0_20] : memref<1x128xf32, #tpu.memory_space<vmem>>, vector<1x128xf32>
      %31 = vector.shape_cast %30 : vector<1x128xf32> to vector<1x128xf32>
      %32 = vector.broadcast %31 : vector<1x128xf32> to vector<16x128xf32>
      %c0_21 = arith.constant 0 : index
      %c0_22 = arith.constant 0 : index
      %33 = vector.load %arg8[%c0_21, %c0_22] : memref<16x128xf32, #tpu.memory_space<vmem>>, vector<16x128xf32>
      tpu.vector_store %arg8[%c0_21, %c0_22], %32 {strides = array<i32>} : memref<16x128xf32, #tpu.memory_space<vmem>>, vector<16x128xf32>,
    } else {
    }
    %c0 = arith.constant 0 : index
    %c0_1 = arith.constant 0 : index
    %3 = vector.load %arg2[%c0, %c0_1] : memref<16x128xf32, #tpu.memory_space<vmem>>, vector<16x128xf32>
    %c0_2 = arith.constant 0 : index
    %c0_3 = arith.constant 0 : index
    %4 = vector.load %arg3[%c0_2, %c0_3] : memref<128x128xf32, #tpu.memory_space<vmem>>, vector<128x128xf32>
    %cst = arith.constant dense<0.000000e+00> : vector<16x128xf32>
    %5 = tpu.matmul %3, %4, %cst {dimension_numbers = #tpu.dot_dimension_numbers<[1], [0], [0], [1], [0, 0, 1, 1], [], []>} : vector<16x128xf32>, vector<128x128xf32>, vector<16x128xf32> -> vector<16x128xf32>
    %c0_4 = arith.constant 0 : index
    %c0_5 = arith.constant 0 : index
    %6 = vector.load %arg4[%c0_4, %c0_5] : memref<1x128xf32, #tpu.memory_space<vmem>>, vector<1x128xf32>
    %7 = vector.broadcast %6 : vector<1x128xf32> to vector<16x128xf32>
    %8 = arith.addf %5, %7 : vector<16x128xf32>
    %cst_6 = arith.constant 5.000000e-01 : f32
    %9 = vector.broadcast %cst_6 : f32 to vector<16x128xf32>
    %10 = arith.mulf %9, %8 : vector<16x128xf32>
    %11 = arith.mulf %8, %8 : vector<16x128xf32>
    %12 = arith.mulf %11, %8 : vector<16x128xf32>
    %cst_7 = arith.constant 4.471500e-02 : f32
    %13 = vector.broadcast %cst_7 : f32 to vector<16x128xf32>
    %14 = arith.mulf %13, %12 : vector<16x128xf32>
    %15 = arith.addf %8, %14 : vector<16x128xf32>
    %cst_8 = arith.constant 0.797884583 : f32
    %16 = vector.broadcast %cst_8 : f32 to vector<16x128xf32>
    %17 = arith.mulf %16, %15 : vector<16x128xf32>
    %18 = math.tanh %17 : vector<16x128xf32>
    %cst_9 = arith.constant 1.000000e+00 : f32
    %19 = vector.broadcast %cst_9 : f32 to vector<16x128xf32>
    %20 = arith.addf %19, %18 : vector<16x128xf32>
    %21 = arith.mulf %10, %20 : vector<16x128xf32>
    %c0_10 = arith.constant 0 : index
    %c0_11 = arith.constant 0 : index
    %22 = vector.load %arg8[%c0_10, %c0_11] : memref<16x128xf32, #tpu.memory_space<vmem>>, vector<16x128xf32>
    %c0_12 = arith.constant 0 : index
    %c0_13 = arith.constant 0 : index
    %23 = vector.load %arg5[%c0_12, %c0_13] : memref<128x128xf32, #tpu.memory_space<vmem>>, vector<128x128xf32>
    %cst_14 = arith.constant dense<0.000000e+00> : vector<16x128xf32>
    %24 = tpu.matmul %21, %23, %cst_14 {dimension_numbers = #tpu.dot_dimension_numbers<[1], [0], [0], [1], [0, 0, 1, 1], [], []>} : vector<16x128xf32>, vector<128x128xf32>, vector<16x128xf32> -> vector<16x128xf32>
    %25 = arith.addf %22, %24 : vector<16x128xf32>
    %c0_15 = arith.constant 0 : index
    %c0_16 = arith.constant 0 : index
    %26 = vector.load %arg8[%c0_15, %c0_16] : memref<16x128xf32, #tpu.memory_space<vmem>>, vector<16x128xf32>
    tpu.vector_store %arg8[%c0_15, %c0_16], %25 {strides = array<i32>} : memref<16x128xf32, #tpu.memory_space<vmem>>, vector<16x128xf32>,
    %c0_i32_17 = arith.constant 0 : i32
    %27 = arith.cmpi eq, %arg1, %c0_i32_17 : i32
    %28 = arith.extui %27 : i1 to i32
    %c0_i32_18 = arith.constant 0 : i32
    %29 = arith.cmpi ne, %28, %c0_i32_18 : i32
    scf.if %29 {
      %c0_19 = arith.constant 0 : index
      %c0_20 = arith.constant 0 : index
      %30 = vector.load %arg8[%c0_19, %c0_20] : memref<16x128xf32, #tpu.memory_space<vmem>>, vector<16x128xf32>
      %c0_21 = arith.constant 0 : index
      %c0_22 = arith.constant 0 : index
      %31 = vector.load %arg7[%c0_21, %c0_22] : memref<16x128xf32, #tpu.memory_space<vmem>>, vector<16x128xf32>
      tpu.vector_store %arg7[%c0_21, %c0_22], %30 {strides = array<i32>} : memref<16x128xf32, #tpu.memory_space<vmem>>, vector<16x128xf32>,
    } else {
    }
    return
  }
  func.func @transform_0(%arg0: i32, %arg1: i32) -> (i32, i32) {
    %c0_i32 = arith.constant 0 : i32
    %c0_i32_0 = arith.constant 0 : i32
    return %arg0, %c0_i32 : i32, i32
  }
  func.func @transform_1(%arg0: i32, %arg1: i32) -> (i32, i32) {
    %c0_i32 = arith.constant 0 : i32
    %c0_i32_0 = arith.constant 0 : i32
    return %c0_i32, %arg1 : i32, i32
  }
  func.func @transform_2(%arg0: i32, %arg1: i32) -> (i32, i32) {
    %c0_i32 = arith.constant 0 : i32
    %c0_i32_0 = arith.constant 0 : i32
    return %c0_i32, %arg1 : i32, i32
  }
  func.func @transform_3(%arg0: i32, %arg1: i32) -> (i32, i32) {
    %c0_i32 = arith.constant 0 : i32
    %c0_i32_0 = arith.constant 0 : i32
    return %arg1, %c0_i32 : i32, i32
  }
  func.func @transform_4(%arg0: i32, %arg1: i32) -> (i32, i32) {
    %c0_i32 = arith.constant 0 : i32
    %c0_i32_0 = arith.constant 0 : i32
    %c0_i32_1 = arith.constant 0 : i32
    return %c0_i32, %c0_i32_0 : i32, i32
  }
  func.func @transform_5(%arg0: i32, %arg1: i32) -> (i32, i32) {
    %c0_i32 = arith.constant 0 : i32
    %c0_i32_0 = arith.constant 0 : i32
    return %arg0, %c0_i32 : i32, i32
  }
}

</mosaic_0001>

<llo_original>
// kernel: tpu_custom_call.1
$region0: #{tpu_custom_call.1}
  #allocation0 [shape = 'u32[]', space=smem, size = 0x4, offset = 0x4, fixed_abs, tag = 'smem constant byte address 0x4 - core index']
  #allocation1 [shape = 'u32[144,128]{1,0:T(1,128)}', space=vmem, size = 0x12000, scoped, tag = 'internal scratch']
  #allocation2 [shape = 'f32[16,128]{1,0:T(8,128)}', space=vmem, size = 0x2000, scoped, tag = 'scratch operand']
  %s0 = inlined_call_operand.hbm [shape: f32[16,128], index: 0, kind: input, shape index: {}]
  %s1 = inlined_call_operand.hbm [shape: f32[128,128], index: 1, kind: input, shape index: {}]
  %s2 = inlined_call_operand.vmem [shape: f32[1,128], index: 2, kind: input, shape index: {}]
  %s3 = inlined_call_operand.hbm [shape: f32[128,128], index: 3, kind: input, shape index: {}]
  %s4 = inlined_call_operand.vmem [shape: f32[1,128], index: 4, kind: input, shape index: {}]
  %s5 = inlined_call_operand.hbm [shape: f32[16,128], index: 5, kind: output, shape index: {}]
  %s6 = sld [smem:[#allocation0]]
  $region50: #{tpu_custom_call.1} parent=0
    _
  %s8 = ssub.s32 1, %s6
  %s9 = scalar_select 0, %s8, %s6
  $region1: #{tpu_custom_call.1} parent=0
    #allocation3 [shape = 'u8[8192]{0}', space=vmem, size = 0x2000, scoped, tag = 'input window, operand 0, single buffered']
    #allocation4 [shape = 's32[1]{0}', space=sflag, size = 0x4, scoped, tag = 'scoped memory for tpu_custom_call.1']
    #allocation5 [shape = 's32[1]{0}', space=sflag, size = 0x4, scoped, tag = 'scoped memory for tpu_custom_call.1']
    #allocation6 [shape = 'u8[65536]{0}', space=vmem, size = 0x10000, scoped, tag = 'input window, operand 1, single buffered']
    #allocation7 [shape = 's32[1]{0}', space=sflag, size = 0x4, scoped, tag = 'scoped memory for tpu_custom_call.1']
    #allocation8 [shape = 'u8[65536]{0}', space=vmem, size = 0x10000, scoped, tag = 'input window, operand 3, single buffered']
    #allocation9 [shape = 'u8[8192]{0}', space=vmem, size = 0x2000, scoped, tag = 'output window, operand 0, single buffered']
    %10 = vsyncpa [#allocation4], 0
    %11 = vsyncpa [#allocation7], 0
    %12 = vsyncpa [#allocation5], 0
    // Predicated region
    $region2: #{tpu_custom_call.1} parent=1 // pred_check
      _
    $region3: #{tpu_custom_call.1} parent=1 // pred_check_branch
      %14 = sbr.rel (0) target = $region5
    $region4: #{tpu_custom_call.1} parent=1 // pred_region
      %s16 = ssub.s32 256, 256
      %17 = vsyncadd [#allocation4], %s16
      %s18 = sshll.u32 [#allocation3], 4
      %s19 = int_to_ptr.vmem [resolvable:$true] %s18
      %24 = dma.hbm_to_vmem [thread:$0]  %s0, 256, %s19, [#allocation4], 128, 128, 8
    $region5: #{tpu_custom_call.1} parent=1 // pred_fallthru
      _
    // Predicated region
    $region6: #{tpu_custom_call.1} parent=1 // pred_check
      _
    $region7: #{tpu_custom_call.1} parent=1 // pred_check_branch
      %26 = sbr.rel (0) target = $region9
    $region8: #{tpu_custom_call.1} parent=1 // pred_region
      %s28 = ssub.s32 2048, 2048
      %29 = vsyncadd [#allocation7], %s28
      %s30 = sshll.u32 [#allocation6], 4
      %s31 = int_to_ptr.vmem [resolvable:$true] %s30
      %36 = dma.hbm_to_vmem [thread:$0]  %s1, 2048, %s31, [#allocation7], 128, 128, 8
    $region9: #{tpu_custom_call.1} parent=1 // pred_fallthru
      _
    // Predicated region
    $region10: #{tpu_custom_call.1} parent=1 // pred_check
      _
    $region11: #{tpu_custom_call.1} parent=1 // pred_check_branch
      %38 = sbr.rel (0) target = $region13
    $region12: #{tpu_custom_call.1} parent=1 // pred_region
      _
    $region13: #{tpu_custom_call.1} parent=1 // pred_fallthru
      _
    // Predicated region
    $region14: #{tpu_custom_call.1} parent=1 // pred_check
      _
    $region15: #{tpu_custom_call.1} parent=1 // pred_check_branch
      %40 = sbr.rel (0) target = $region17
    $region16: #{tpu_custom_call.1} parent=1 // pred_region
      %s42 = ssub.s32 2048, 2048
      %43 = vsyncadd [#allocation7], %s42
      %s44 = sshll.u32 [#allocation8], 4
      %s45 = int_to_ptr.vmem [resolvable:$true] %s44
      %50 = dma.hbm_to_vmem [thread:$0]  %s3, 2048, %s45, [#allocation7], 128, 128, 8
    $region17: #{tpu_custom_call.1} parent=1 // pred_fallthru
      _
    // Predicated region
    $region18: #{tpu_custom_call.1} parent=1 // pred_check
      _
    $region19: #{tpu_custom_call.1} parent=1 // pred_check_branch
      %52 = sbr.rel (0) target = $region21
    $region20: #{tpu_custom_call.1} parent=1 // pred_region
      _
    $region21: #{tpu_custom_call.1} parent=1 // pred_fallthru
      _
    // Predicated region
    $region22: #{tpu_custom_call.1} parent=1 // pred_check
      _
    $region23: #{tpu_custom_call.1} parent=1 // pred_check_branch
      %54 = sbr.rel (0) target = $region25
    $region24: #{tpu_custom_call.1} parent=1 // pred_region
      %55 = dma.done [#allocation4], 256
    $region25: #{tpu_custom_call.1} parent=1 // pred_fallthru
      _
    // Predicated region
    $region26: #{tpu_custom_call.1} parent=1 // pred_check
      _
    $region27: #{tpu_custom_call.1} parent=1 // pred_check_branch
      %57 = sbr.rel (0) target = $region29
    $region28: #{tpu_custom_call.1} parent=1 // pred_region
      %58 = dma.done [#allocation7], 2048
    $region29: #{tpu_custom_call.1} parent=1 // pred_fallthru
      _
    // Predicated region
    $region30: #{tpu_custom_call.1} parent=1 // pred_check
      _
    $region31: #{tpu_custom_call.1} parent=1 // pred_check_branch
      %60 = sbr.rel (0) target = $region33
    $region32: #{tpu_custom_call.1} parent=1 // pred_region
      %61 = dma.done [#allocation7], 2048
    $region33: #{tpu_custom_call.1} parent=1 // pred_fallthru
      _
    %p62 = scmp.eq.s32.totalorder 0, 0
    // Predicated region
    $region34: #{tpu_custom_call.1} parent=1 // pred_check
      %p63 = pneg %p62
    $region35: #{tpu_custom_call.1} parent=1 // pred_check_branch
      %65 = sbr.rel (%p63) target = $region37
    $region36: #{tpu_custom_call.1} parent=1 // pred_region
      %v66 = vld [vmem:[%s4] sm:$0x1]
      %v68 = vlaneseq
      %v69 = vshrl.u32 %v68, 7
      %v70 = vsub.s32 0, %v69
      %v71 = vrot.slane %v66, %v70
      %73 = vst [vmem:[#allocation2] sm:$0xff] %v71
      %74 = vst [vmem:[#allocation2 + $0x8] sm:$0xff] %v71
    $region37: #{tpu_custom_call.1} parent=1 // pred_fallthru
      _
    %v75 = vld [vmem:[#allocation3] sm:$0xff]
    %v76 = vld [vmem:[#allocation3 + $0x8] sm:$0xff]
    %v77 = vld [vmem:[#allocation6] sm:$0xff]
    %v78 = vld [vmem:[#allocation6 + $0x8] sm:$0xff]
    %v79 = vld [vmem:[#allocation6 + $0x10] sm:$0xff]
    %v80 = vld [vmem:[#allocation6 + $0x18] sm:$0xff]
    %v81 = vld [vmem:[#allocation6 + $0x20] sm:$0xff]
    %v82 = vld [vmem:[#allocation6 + $0x28] sm:$0xff]
    %v83 = vld [vmem:[#allocation6 + $0x30] sm:$0xff]
    %v84 = vld [vmem:[#allocation6 + $0x38] sm:$0xff]
    %v85 = vld [vmem:[#allocation6 + $0x40] sm:$0xff]
    %v86 = vld [vmem:[#allocation6 + $0x48] sm:$0xff]
    %v87 = vld [vmem:[#allocation6 + $0x50] sm:$0xff]
    %v88 = vld [vmem:[#allocation6 + $0x58] sm:$0xff]
    %v89 = vld [vmem:[#allocation6 + $0x60] sm:$0xff]
    %v90 = vld [vmem:[#allocation6 + $0x68] sm:$0xff]
    %v91 = vld [vmem:[#allocation6 + $0x70] sm:$0xff]
    %v92 = vld [vmem:[#allocation6 + $0x78] sm:$0xff]
    %v93 = vld [vmem:[%s2] sm:$0x1]
    %v95 = vlaneseq
    %v96 = vshrl.u32 %v95, 7
    %v97 = vsub.s32 0, %v96
    %v98 = vrot.slane %v93, %v97
    %100 = vmatprep.subr.mxu0 0.0
    %101 = vmatpush1.msra.mxu0 %v77
    %102 = vmatprep.subr.mxu0 0.0
    %103 = vmatpush1.msra.mxu0 %v78
    %104 = vmatprep.subr.mxu0 0.0
    %105 = vmatpush1.msra.mxu0 %v79
    %106 = vmatprep.subr.mxu0 0.0
    %107 = vmatpush1.msra.mxu0 %v80
    %108 = vmatprep.subr.mxu0 0.0
    %109 = vmatpush1.msra.mxu0 %v81
    %110 = vmatprep.subr.mxu0 0.0
    %111 = vmatpush1.msra.mxu0 %v82
    %112 = vmatprep.subr.mxu0 0.0
    %113 = vmatpush1.msra.mxu0 %v83
    %114 = vmatprep.subr.mxu0 0.0
    %115 = vmatpush1.msra.mxu0 %v84
    %116 = vmatprep.subr.mxu0 0.0
    %117 = vmatpush1.msra.mxu0 %v85
    %118 = vmatprep.subr.mxu0 0.0
    %119 = vmatpush1.msra.mxu0 %v86
    %120 = vmatprep.subr.mxu0 0.0
    %121 = vmatpush1.msra.mxu0 %v87
    %122 = vmatprep.subr.mxu0 0.0
    %123 = vmatpush1.msra.mxu0 %v88
    %124 = vmatprep.subr.mxu0 0.0
    %125 = vmatpush1.msra.mxu0 %v89
    %126 = vmatprep.subr.mxu0 0.0
    %127 = vmatpush1.msra.mxu0 %v90
    %128 = vmatprep.subr.mxu0 0.0
    %129 = vmatpush1.msra.mxu0 %v91
    %130 = vmatprep.subr.mxu0 0.0
    %131 = vmatpush1.msra.mxu0 %v92
    %132 = vmatprep.subr.mxu0 0.0
    %133 = vmatpush1.msra.mxu0 0.0
    %134 = vmatprep.subr.mxu0 0.0
    %135 = vmatpush1.msra.mxu0 0.0
    %136 = vmatprep.subr.mxu0 0.0
    %137 = vmatpush1.msra.mxu0 0.0
    %138 = vmatprep.subr.mxu0 0.0
    %139 = vmatpush1.msra.mxu0 0.0
    %140 = vmatprep.subr.mxu0 0.0
    %141 = vmatpush1.msra.mxu0 0.0
    %142 = vmatprep.subr.mxu0 0.0
    %143 = vmatpush1.msra.mxu0 0.0
    %144 = vmatprep.subr.mxu0 0.0
    %145 = vmatpush1.msra.mxu0 0.0
    %146 = vmatprep.subr.mxu0 0.0
    %147 = vmatpush1.msra.mxu0 0.0
    %148 = vmatprep.subr.mxu0 0.0
    %149 = vmatpush1.msra.mxu0 0.0
    %150 = vmatprep.subr.mxu0 0.0
    %151 = vmatpush1.msra.mxu0 0.0
    %152 = vmatprep.subr.mxu0 0.0
    %153 = vmatpush1.msra.mxu0 0.0
    %154 = vmatprep.subr.mxu0 0.0
    %155 = vmatpush1.msra.mxu0 0.0
    %156 = vmatprep.subr.mxu0 0.0
    %157 = vmatpush1.msra.mxu0 0.0
    %158 = vmatprep.subr.mxu0 0.0
    %159 = vmatpush1.msra.mxu0 0.0
    %160 = vmatprep.subr.mxu0 0.0
    %161 = vmatpush1.msra.mxu0 0.0
    %162 = vmatprep.subr.mxu0 0.0
    %163 = vmatpush1.msra.mxu0 0.0
    %164 = vmatprep.mubr.f32.mxu0 0.0
    %165 = vmatmul.mubr.f32.gmra.mrb[0].mxu0 %v75
    %v166 = vpop.f32.mrb[0].mxu0
    %v167 = vadd.f32 %v98, %v166
    %v168 = vpop.f32.mrb[0].mxu0
    %169 = vmatprep.mubr.f32.mxu0 0.0
    %170 = vmatmul.mubr.f32.gmra.mrb[0].mxu0 %v76
    %v171 = vpop.f32.mrb[0].mxu0
    %v172 = vadd.f32 %v98, %v171
    %v173 = vpop.f32.mrb[0].mxu0
    %174 = vdwg.mxu0
    %v175 = vmul.f32 %v167, 0.5
    %v176 = vmul.f32 %v172, 0.5
    %v177 = vmul.f32 %v167, %v167
    %v178 = vmul.f32 %v172, %v172
    %v179 = vmul.f32 %v177, %v167
    %v180 = vmul.f32 %v178, %v172
    %v181 = vmul.f32 %v179, 0.044715
    %v182 = vmul.f32 %v180, 0.044715
    %v183 = vadd.f32 %v167, %v181
    %v184 = vadd.f32 %v172, %v182
    %v185 = vmul.f32 %v183, 0.7978846
    %v186 = vmul.f32 %v184, 0.7978846
    %v187 = vtanh.pop %v185
    %v188 = vtanh.pop %v186
    %v189 = vadd.f32 %v187, 1.0
    %v190 = vadd.f32 %v188, 1.0
    %v191 = vmul.f32 %v175, %v189
    %v192 = vmul.f32 %v176, %v190
    %v193 = vld [vmem:[#allocation2] sm:$0xff]
    %v194 = vld [vmem:[#allocation2 + $0x8] sm:$0xff]
    %v195 = vld [vmem:[#allocation8] sm:$0xff]
    %v196 = vld [vmem:[#allocation8 + $0x8] sm:$0xff]
    %v197 = vld [vmem:[#allocation8 + $0x10] sm:$0xff]
    %v198 = vld [vmem:[#allocation8 + $0x18] sm:$0xff]
    %v199 = vld [vmem:[#allocation8 + $0x20] sm:$0xff]
    %v200 = vld [vmem:[#allocation8 + $0x28] sm:$0xff]
    %v201 = vld [vmem:[#allocation8 + $0x30] sm:$0xff]
    %v202 = vld [vmem:[#allocation8 + $0x38] sm:$0xff]
    %v203 = vld [vmem:[#allocation8 + $0x40] sm:$0xff]
    %v204 = vld [vmem:[#allocation8 + $0x48] sm:$0xff]
    %v205 = vld [vmem:[#allocation8 + $0x50] sm:$0xff]
    %v206 = vld [vmem:[#allocation8 + $0x58] sm:$0xff]
    %v207 = vld [vmem:[#allocation8 + $0x60] sm:$0xff]
    %v208 = vld [vmem:[#allocation8 + $0x68] sm:$0xff]
    %v209 = vld [vmem:[#allocation8 + $0x70] sm:$0xff]
    %v210 = vld [vmem:[#allocation8 + $0x78] sm:$0xff]
    %211 = vmatprep.subr.mxu0 0.0
    %212 = vmatpush1.msra.mxu0 %v195
    %213 = vmatprep.subr.mxu0 0.0
    %214 = vmatpush1.msra.mxu0 %v196
    %215 = vmatprep.subr.mxu0 0.0
    %216 = vmatpush1.msra.mxu0 %v197
    %217 = vmatprep.subr.mxu0 0.0
    %218 = vmatpush1.msra.mxu0 %v198
    %219 = vmatprep.subr.mxu0 0.0
    %220 = vmatpush1.msra.mxu0 %v199
    %221 = vmatprep.subr.mxu0 0.0
    %222 = vmatpush1.msra.mxu0 %v200
    %223 = vmatprep.subr.mxu0 0.0
    %224 = vmatpush1.msra.mxu0 %v201
    %225 = vmatprep.subr.mxu0 0.0
    %226 = vmatpush1.msra.mxu0 %v202
    %227 = vmatprep.subr.mxu0 0.0
    %228 = vmatpush1.msra.mxu0 %v203
    %229 = vmatprep.subr.mxu0 0.0
    %230 = vmatpush1.msra.mxu0 %v204
    %231 = vmatprep.subr.mxu0 0.0
    %232 = vmatpush1.msra.mxu0 %v205
    %233 = vmatprep.subr.mxu0 0.0
    %234 = vmatpush1.msra.mxu0 %v206
    %235 = vmatprep.subr.mxu0 0.0
    %236 = vmatpush1.msra.mxu0 %v207
    %237 = vmatprep.subr.mxu0 0.0
    %238 = vmatpush1.msra.mxu0 %v208
    %239 = vmatprep.subr.mxu0 0.0
    %240 = vmatpush1.msra.mxu0 %v209
    %241 = vmatprep.subr.mxu0 0.0
    %242 = vmatpush1.msra.mxu0 %v210
    %243 = vmatprep.subr.mxu0 0.0
    %244 = vmatpush1.msra.mxu0 0.0
    %245 = vmatprep.subr.mxu0 0.0
    %246 = vmatpush1.msra.mxu0 0.0
    %247 = vmatprep.subr.mxu0 0.0
    %248 = vmatpush1.msra.mxu0 0.0
    %249 = vmatprep.subr.mxu0 0.0
    %250 = vmatpush1.msra.mxu0 0.0
    %251 = vmatprep.subr.mxu0 0.0
    %252 = vmatpush1.msra.mxu0 0.0
    %253 = vmatprep.subr.mxu0 0.0
    %254 = vmatpush1.msra.mxu0 0.0
    %255 = vmatprep.subr.mxu0 0.0
    %256 = vmatpush1.msra.mxu0 0.0
    %257 = vmatprep.subr.mxu0 0.0
    %258 = vmatpush1.msra.mxu0 0.0
    %259 = vmatprep.subr.mxu0 0.0
    %260 = vmatpush1.msra.mxu0 0.0
    %261 = vmatprep.subr.mxu0 0.0
    %262 = vmatpush1.msra.mxu0 0.0
    %263 = vmatprep.subr.mxu0 0.0
    %264 = vmatpush1.msra.mxu0 0.0
    %265 = vmatprep.subr.mxu0 0.0
    %266 = vmatpush1.msra.mxu0 0.0
    %267 = vmatprep.subr.mxu0 0.0
    %268 = vmatpush1.msra.mxu0 0.0
    %269 = vmatprep.subr.mxu0 0.0
    %270 = vmatpush1.msra.mxu0 0.0
    %271 = vmatprep.subr.mxu0 0.0
    %272 = vmatpush1.msra.mxu0 0.0
    %273 = vmatprep.subr.mxu0 0.0
    %274 = vmatpush1.msra.mxu0 0.0
    %275 = vmatprep.mubr.f32.mxu0 0.0
    %276 = vmatmul.mubr.f32.gmra.mrb[0].mxu0 %v191
    %v277 = vpop.f32.mrb[0].mxu0
    %v278 = vadd.f32 0.0, %v277
    %v279 = vpop.f32.mrb[0].mxu0
    %280 = vmatprep.mubr.f32.mxu0 0.0
    %281 = vmatmul.mubr.f32.gmra.mrb[0].mxu0 %v192
    %v282 = vpop.f32.mrb[0].mxu0
    %v283 = vadd.f32 0.0, %v282
    %v284 = vpop.f32.mrb[0].mxu0
    %285 = vdwg.mxu0
    %v286 = vadd.f32 %v193, %v278
    %v287 = vadd.f32 %v194, %v283
    %288 = vst [vmem:[#allocation2] sm:$0xff] %v286
    %289 = vst [vmem:[#allocation2 + $0x8] sm:$0xff] %v287
    // Predicated region
    $region38: #{tpu_custom_call.1} parent=1 // pred_check
      %p290 = pneg %p62
    $region39: #{tpu_custom_call.1} parent=1 // pred_check_branch
      %292 = sbr.rel (%p290) target = $region41
    $region40: #{tpu_custom_call.1} parent=1 // pred_region
      %v293 = vld [vmem:[#allocation2] sm:$0xff]
      %v294 = vld [vmem:[#allocation2 + $0x8] sm:$0xff]
      %295 = vst [vmem:[#allocation9] sm:$0xff] %v293
      %296 = vst [vmem:[#allocation9 + $0x8] sm:$0xff] %v294
    $region41: #{tpu_custom_call.1} parent=1 // pred_fallthru
      _
    // Predicated region
    $region42: #{tpu_custom_call.1} parent=1 // pred_check
      _
    $region43: #{tpu_custom_call.1} parent=1 // pred_check_branch
      %298 = sbr.rel (0) target = $region45
    $region44: #{tpu_custom_call.1} parent=1 // pred_region
      %s300 = ssub.s32 256, 256
      %301 = vsyncadd [#allocation5], %s300
      %s302 = sshll.u32 [#allocation9], 4
      %s303 = int_to_ptr.vmem [resolvable:$true] %s302
      %308 = dma.vmem_to_hbm [thread:$0]  %s303, 256, %s5, [#allocation5], 128, 128, 8
    $region45: #{tpu_custom_call.1} parent=1 // pred_fallthru
      _
    // Predicated region
    $region46: #{tpu_custom_call.1} parent=1 // pred_check
      _
    $region47: #{tpu_custom_call.1} parent=1 // pred_check_branch
      %310 = sbr.rel (0) target = $region49
    $region48: #{tpu_custom_call.1} parent=1 // pred_region
      %311 = dma.done [#allocation5], 256
    $region49: #{tpu_custom_call.1} parent=1 // pred_fallthru
      _
    %312 = vsyncpa [#allocation4], 1
    %313 = vsyncpa [#allocation7], 1
    %314 = vsyncpa [#allocation5], 1

</llo_original>
